<compile_context>
chip_gen: v7x
topology: tpu7x:2x2x1
jax: 0.10.0
libtpu: 0.0.40
codegen_flags: <defaults>
</compile_context>

<pallas_src>
import functools
import math

import jax
import jax.numpy as jnp
from jax.experimental import pallas as pl
from jax.experimental.pallas import tpu as pltpu


MIN_VALUE = 0.01
MAX_VALUE = 0.02

IN_FEATURES = 3
OUT_FEATURES = 8
LANES = 128
PACK = LANES // OUT_FEATURES          # 16 logical rows per physical row

# Fixed cap on packed rows per grid step.  8192 packed rows:
#   input  8192 * 48  * 4B = 1.5 MiB
#   output 8192 * 128 * 4B = 4.0 MiB
# -> ~11 MiB double-buffered; fits every generation's scoped-VMEM default.
_ROW_TILE = 8192


def _linear_clamp_kernel(x_ref, w_ref, b_ref, o_ref, *, min_value, max_value):
    # x_ref: (tm, K*PACK)  w_ref: (K*PACK, 128)  b_ref: (1, 128)  o_ref: (tm, 128)
    y = jnp.dot(x_ref[...], w_ref[...], preferred_element_type=jnp.float32)
    y = y + b_ref[...]                    # broadcast (1, 128) over rows
    y = jnp.maximum(y, min_value)         # clamp_min
    y = jnp.minimum(y, max_value)         # clamp_max
    o_ref[...] = y.astype(o_ref.dtype)


def pack_params(weight, bias):
    """Build the packed (block-diagonal) weight and tiled bias ONCE.

    weight: (N, K) in PyTorch layout; bias: (N,).
    Returns w_big: (K*PACK, 128) f32, b_big: (1, 128) f32.
    """
    n, k = weight.shape
    assert n == OUT_FEATURES and k == IN_FEATURES
    w_t = weight.T.astype(jnp.float32)                              # (K, N)
    w_big = jnp.kron(jnp.eye(PACK, dtype=jnp.float32), w_t)         # (K*PACK, 128)
    b_big = jnp.tile(bias.astype(jnp.float32), PACK).reshape(1, LANES)
    return w_big, b_big


def linear_clamp(x, w_big, b_big, *, min_value=MIN_VALUE, max_value=MAX_VALUE):
    """x: (..., 3) -> (..., 8). w_big/b_big from pack_params."""
    assert x.shape[-1] == IN_FEATURES
    lead_shape = x.shape[:-1]
    M = math.prod(lead_shape) if lead_shape else 1
    out_dtype = x.dtype

    x2 = x.reshape(M, IN_FEATURES)

    # Pad logical rows up to a multiple of PACK (<= 15 dummy rows) so the
    # lane-dense packed path is unconditional.
    Mp = pl.cdiv(M, PACK)                     # packed rows (ceil)
    m_pad = Mp * PACK
    if m_pad != M:
        x2 = jnp.pad(x2, ((0, m_pad - M), (0, 0)))
    xp = x2.reshape(Mp, IN_FEATURES * PACK)   # (Mp, 48), free row-major reshape

    # Fixed row tile (multiple of 8), cdiv grid, pad packed rows to a multiple.
    tm = min(_ROW_TILE, ((Mp + 7) // 8) * 8)
    grid_m = pl.cdiv(Mp, tm)
    mp_pad = grid_m * tm
    if mp_pad != Mp:
        xp = jnp.pad(xp, ((0, mp_pad - Mp), (0, 0)))

    kernel = functools.partial(
        _linear_clamp_kernel, min_value=min_value, max_value=max_value)

    out = pl.pallas_call(
        kernel,
        out_shape=jax.ShapeDtypeStruct((mp_pad, LANES), out_dtype),
        grid=(grid_m,),
        in_specs=[
            pl.BlockSpec((tm, IN_FEATURES * PACK), lambda i: (i, 0)),  # x tile
            pl.BlockSpec((IN_FEATURES * PACK, LANES), lambda i: (0, 0)),  # weight (resident)
            pl.BlockSpec((1, LANES), lambda i: (0, 0)),                   # bias (resident)
        ],
        out_specs=pl.BlockSpec((tm, LANES), lambda i: (i, 0)),
        compiler_params=pltpu.CompilerParams(
            dimension_semantics=("parallel",)),
    )(xp, w_big, b_big)

    # Unpack lanes back to logical rows, drop padding, restore leading shape.
    out = out.reshape(mp_pad * PACK, OUT_FEATURES)[:M]
    return out.reshape(*lead_shape, OUT_FEATURES)


def reference(x, weight, bias):
    y = jnp.einsum("...k,nk->...n", x.astype(jnp.float32),
                   weight.astype(jnp.float32)) + bias.astype(jnp.float32)
    return jnp.minimum(jnp.maximum(y, MIN_VALUE), MAX_VALUE).astype(x.dtype)


if __name__ == "__main__":
    key = jax.random.PRNGKey(0)
    kx, kw, kb = jax.random.split(key, 3)

    # Small input with trailing dim 3 so Linear(3, 8) applies.
    x1 = jax.random.normal(kx, (2, 16, 16, 3), dtype=jnp.float32)

    # Deterministic synthetic parameters (nn.Linear(3, 8) shapes).
    bound = 1.0 / (IN_FEATURES ** 0.5)
    weight = jax.random.uniform(kw, (OUT_FEATURES, IN_FEATURES),
                                minval=-bound, maxval=bound,
                                dtype=jnp.float32)
    bias = jax.random.uniform(kb, (OUT_FEATURES,),
                              minval=-bound, maxval=bound,
                              dtype=jnp.float32)

    # Pack parameters once (outside the hot path).
    w_big, b_big = pack_params(weight, bias)

    out = linear_clamp(x1, w_big, b_big)
    out = jax.block_until_ready(out)

    ref = reference(x1, weight, bias)
    assert out.shape == (2, 16, 16, 8), out.shape
    assert out.dtype == x1.dtype, out.dtype
    assert jnp.allclose(out, ref, atol=1e-5, rtol=1e-5), "mismatch vs reference"

    # Also exercise an M % 16 != 0 case to cover the row-padding path.
    x_odd = jax.random.normal(kx, (5, 7, 3), dtype=jnp.float32)
    out_odd = jax.block_until_ready(linear_clamp(x_odd, w_big, b_big))
    assert out_odd.shape == (5, 7, 8)
    assert jnp.allclose(out_odd, reference(x_odd, weight, bias),
                        atol=1e-5, rtol=1e-5), "mismatch vs reference (odd M)"

    print("KERNEL_OK")
</pallas_src>

<mosaic_0001>
module attributes {stable_mosaic.version = 11 : i64} {
  func.func @_linear_clamp_kernel(%arg0: i32, %arg1: memref<32x48xf32, #tpu.memory_space<vmem>>, %arg2: memref<48x128xf32, #tpu.memory_space<vmem>>, %arg3: memref<1x128xf32, #tpu.memory_space<vmem>>, %arg4: memref<32x128xf32, #tpu.memory_space<vmem>>) attributes {dimension_semantics = [#tpu.dimension_semantics<parallel>], iteration_bounds = array<i64: 1>, scalar_prefetch = 0 : i64, scratch_operands = 0 : i64, tpu.core_type = #tpu.core_type<tc>, window_params = [{transform_indices = @transform_0, window_bounds = array<i64: 32, 48>}, {pipeline_mode = #tpu.pipeline_mode<synchronous>, transform_indices = @transform_1, window_bounds = array<i64: 48, 128>}, {pipeline_mode = #tpu.pipeline_mode<synchronous>, transform_indices = @transform_2, window_bounds = array<i64: 1, 128>}, {transform_indices = @transform_3, window_bounds = array<i64: 32, 128>}]} {
    %c0 = arith.constant 0 : index
    %c0_0 = arith.constant 0 : index
    %0 = vector.load %arg1[%c0, %c0_0] : memref<32x48xf32, #tpu.memory_space<vmem>>, vector<32x48xf32>
    %c0_1 = arith.constant 0 : index
    %c0_2 = arith.constant 0 : index
    %1 = vector.load %arg2[%c0_1, %c0_2] : memref<48x128xf32, #tpu.memory_space<vmem>>, vector<48x128xf32>
    %cst = arith.constant dense<0.000000e+00> : vector<32x128xf32>
    %2 = tpu.matmul %0, %1, %cst {dimension_numbers = #tpu.dot_dimension_numbers<[1], [0], [0], [1], [0, 0, 1, 1], [], []>} : vector<32x48xf32>, vector<48x128xf32>, vector<32x128xf32> -> vector<32x128xf32>
    %c0_3 = arith.constant 0 : index
    %c0_4 = arith.constant 0 : index
    %3 = vector.load %arg3[%c0_3, %c0_4] : memref<1x128xf32, #tpu.memory_space<vmem>>, vector<1x128xf32>
    %4 = vector.broadcast %3 : vector<1x128xf32> to vector<32x128xf32>
    %5 = arith.addf %2, %4 : vector<32x128xf32>
    %cst_5 = arith.constant 0.00999999977 : f32
    %6 = vector.broadcast %cst_5 : f32 to vector<32x128xf32>
    %7 = arith.maximumf %5, %6 : vector<32x128xf32>
    %cst_6 = arith.constant 2.000000e-02 : f32
    %8 = vector.broadcast %cst_6 : f32 to vector<32x128xf32>
    %9 = arith.minimumf %7, %8 : vector<32x128xf32>
    %c0_7 = arith.constant 0 : index
    %c0_8 = arith.constant 0 : index
    %10 = vector.load %arg4[%c0_7, %c0_8] : memref<32x128xf32, #tpu.memory_space<vmem>>, vector<32x128xf32>
    tpu.vector_store %arg4[%c0_7, %c0_8], %9 {strides = array<i32>} : memref<32x128xf32, #tpu.memory_space<vmem>>, vector<32x128xf32>,
    return
  }
  func.func @transform_0(%arg0: i32) -> (i32, i32) {
    %c0_i32 = arith.constant 0 : i32
    %c0_i32_0 = arith.constant 0 : i32
    return %arg0, %c0_i32 : i32, i32
  }
  func.func @transform_1(%arg0: i32) -> (i32, i32) {
    %c0_i32 = arith.constant 0 : i32
    %c0_i32_0 = arith.constant 0 : i32
    %c0_i32_1 = arith.constant 0 : i32
    return %c0_i32, %c0_i32_0 : i32, i32
  }
  func.func @transform_2(%arg0: i32) -> (i32, i32) {
    %c0_i32 = arith.constant 0 : i32
    %c0_i32_0 = arith.constant 0 : i32
    %c0_i32_1 = arith.constant 0 : i32
    return %c0_i32, %c0_i32_0 : i32, i32
  }
  func.func @transform_3(%arg0: i32) -> (i32, i32) {
    %c0_i32 = arith.constant 0 : i32
    %c0_i32_0 = arith.constant 0 : i32
    return %arg0, %c0_i32 : i32, i32
  }
}

</mosaic_0001>

<llo_original>
// kernel: tpu_custom_call.1
$region0: #{tpu_custom_call.1}
  #allocation0 [shape = 'u32[]', space=smem, size = 0x4, offset = 0x4, fixed_abs, tag = 'smem constant byte address 0x4 - core index']
  #allocation1 [shape = 'u32[144,128]{1,0:T(1,128)}', space=vmem, size = 0x12000, scoped, tag = 'internal scratch']
  %s0 = inlined_call_operand.hbm [shape: f32[32,48], index: 0, kind: input, shape index: {}]
  %s1 = inlined_call_operand.hbm [shape: f32[48,128], index: 1, kind: input, shape index: {}]
  %s2 = inlined_call_operand.vmem [shape: f32[1,128], index: 2, kind: input, shape index: {}]
  %s3 = inlined_call_operand.hbm [shape: f32[32,128], index: 3, kind: output, shape index: {}]
  %s4 = sld [smem:[#allocation0]]
  $region30: #{tpu_custom_call.1} parent=0
    _
  %s6 = ssub.s32 1, %s4
  %s7 = scalar_select 0, %s6, %s4
  $region1: #{tpu_custom_call.1} parent=0
    #allocation2 [shape = 'u8[16384]{0}', space=vmem, size = 0x4000, scoped, tag = 'input window, operand 0, single buffered']
    #allocation3 [shape = 's32[1]{0}', space=sflag, size = 0x4, scoped, tag = 'scoped memory for tpu_custom_call.1']
    #allocation4 [shape = 's32[1]{0}', space=sflag, size = 0x4, scoped, tag = 'scoped memory for tpu_custom_call.1']
    #allocation5 [shape = 'u8[24576]{0}', space=vmem, size = 0x6000, scoped, tag = 'input window, operand 1, single buffered']
    #allocation6 [shape = 's32[1]{0}', space=sflag, size = 0x4, scoped, tag = 'scoped memory for tpu_custom_call.1']
    #allocation7 [shape = 'u8[16384]{0}', space=vmem, size = 0x4000, scoped, tag = 'output window, operand 0, single buffered']
    %8 = vsyncpa [#allocation3], 0
    %9 = vsyncpa [#allocation6], 0
    %10 = vsyncpa [#allocation4], 0
    // Predicated region
    $region2: #{tpu_custom_call.1} parent=1 // pred_check
      _
    $region3: #{tpu_custom_call.1} parent=1 // pred_check_branch
      %12 = sbr.rel (0) target = $region5
    $region4: #{tpu_custom_call.1} parent=1 // pred_region
      %s14 = ssub.s32 512, 512
      %15 = vsyncadd [#allocation3], %s14
      %s16 = sshll.u32 [#allocation2], 4
      %s17 = int_to_ptr.vmem [resolvable:$true] %s16
      %22 = dma.hbm_to_vmem [thread:$0]  %s0, 512, %s17, [#allocation3], 128, 128, 8
    $region5: #{tpu_custom_call.1} parent=1 // pred_fallthru
      _
    // Predicated region
    $region6: #{tpu_custom_call.1} parent=1 // pred_check
      _
    $region7: #{tpu_custom_call.1} parent=1 // pred_check_branch
      %24 = sbr.rel (0) target = $region9
    $region8: #{tpu_custom_call.1} parent=1 // pred_region
      %s26 = ssub.s32 768, 768
      %27 = vsyncadd [#allocation6], %s26
      %s28 = sshll.u32 [#allocation5], 4
      %s29 = int_to_ptr.vmem [resolvable:$true] %s28
      %34 = dma.hbm_to_vmem [thread:$0]  %s1, 768, %s29, [#allocation6], 128, 128, 8
    $region9: #{tpu_custom_call.1} parent=1 // pred_fallthru
      _
    // Predicated region
    $region10: #{tpu_custom_call.1} parent=1 // pred_check
      _
    $region11: #{tpu_custom_call.1} parent=1 // pred_check_branch
      %36 = sbr.rel (0) target = $region13
    $region12: #{tpu_custom_call.1} parent=1 // pred_region
      _
    $region13: #{tpu_custom_call.1} parent=1 // pred_fallthru
      _
    // Predicated region
    $region14: #{tpu_custom_call.1} parent=1 // pred_check
      _
    $region15: #{tpu_custom_call.1} parent=1 // pred_check_branch
      %38 = sbr.rel (0) target = $region17
    $region16: #{tpu_custom_call.1} parent=1 // pred_region
      %39 = dma.done [#allocation3], 512
    $region17: #{tpu_custom_call.1} parent=1 // pred_fallthru
      _
    // Predicated region
    $region18: #{tpu_custom_call.1} parent=1 // pred_check
      _
    $region19: #{tpu_custom_call.1} parent=1 // pred_check_branch
      %41 = sbr.rel (0) target = $region21
    $region20: #{tpu_custom_call.1} parent=1 // pred_region
      %42 = dma.done [#allocation6], 768
    $region21: #{tpu_custom_call.1} parent=1 // pred_fallthru
      _
    %v43 = vld [vmem:[#allocation2] sm:$0xff]
    %v44 = vld [vmem:[#allocation2 + $0x8] sm:$0xff]
    %v45 = vld [vmem:[#allocation2 + $0x10] sm:$0xff]
    %v46 = vld [vmem:[#allocation2 + $0x18] sm:$0xff]
    %v47 = vld [vmem:[#allocation5] sm:$0xff]
    %v48 = vld [vmem:[#allocation5 + $0x8] sm:$0xff]
    %v49 = vld [vmem:[#allocation5 + $0x10] sm:$0xff]
    %v50 = vld [vmem:[#allocation5 + $0x18] sm:$0xff]
    %v51 = vld [vmem:[#allocation5 + $0x20] sm:$0xff]
    %v52 = vld [vmem:[#allocation5 + $0x28] sm:$0xff]
    %v53 = vld [vmem:[%s2] sm:$0x1]
    %v55 = vlaneseq
    %v56 = vshrl.u32 %v55, 7
    %v57 = vsub.s32 0, %v56
    %v58 = vrot.slane %v53, %v57
    %vm60 = vcmask 392192
    %v62 = vsel %vm60, %v43, 0
    %v65 = vsel %vm60, %v44, 0
    %v68 = vsel %vm60, %v45, 0
    %v71 = vsel %vm60, %v46, 0
    %73 = vmatprep.subr.mxu0 0.0
    %74 = vmatpush1.msra.mxu0 %v47
    %75 = vmatprep.subr.mxu0 0.0
    %76 = vmatpush1.msra.mxu0 %v48
    %77 = vmatprep.subr.mxu0 0.0
    %78 = vmatpush1.msra.mxu0 %v49
    %79 = vmatprep.subr.mxu0 0.0
    %80 = vmatpush1.msra.mxu0 %v50
    %81 = vmatprep.subr.mxu0 0.0
    %82 = vmatpush1.msra.mxu0 %v51
    %83 = vmatprep.subr.mxu0 0.0
    %84 = vmatpush1.msra.mxu0 %v52
    %85 = vmatprep.subr.mxu0 0.0
    %86 = vmatpush1.msra.mxu0 0.0
    %87 = vmatprep.subr.mxu0 0.0
    %88 = vmatpush1.msra.mxu0 0.0
    %89 = vmatprep.subr.mxu0 0.0
    %90 = vmatpush1.msra.mxu0 0.0
    %91 = vmatprep.subr.mxu0 0.0
    %92 = vmatpush1.msra.mxu0 0.0
    %93 = vmatprep.subr.mxu0 0.0
    %94 = vmatpush1.msra.mxu0 0.0
    %95 = vmatprep.subr.mxu0 0.0
    %96 = vmatpush1.msra.mxu0 0.0
    %97 = vmatprep.subr.mxu0 0.0
    %98 = vmatpush1.msra.mxu0 0.0
    %99 = vmatprep.subr.mxu0 0.0
    %100 = vmatpush1.msra.mxu0 0.0
    %101 = vmatprep.subr.mxu0 0.0
    %102 = vmatpush1.msra.mxu0 0.0
    %103 = vmatprep.subr.mxu0 0.0
    %104 = vmatpush1.msra.mxu0 0.0
    %105 = vmatprep.subr.mxu0 0.0
    %106 = vmatpush1.msra.mxu0 0.0
    %107 = vmatprep.subr.mxu0 0.0
    %108 = vmatpush1.msra.mxu0 0.0
    %109 = vmatprep.subr.mxu0 0.0
    %110 = vmatpush1.msra.mxu0 0.0
    %111 = vmatprep.subr.mxu0 0.0
    %112 = vmatpush1.msra.mxu0 0.0
    %113 = vmatprep.subr.mxu0 0.0
    %114 = vmatpush1.msra.mxu0 0.0
    %115 = vmatprep.subr.mxu0 0.0
    %116 = vmatpush1.msra.mxu0 0.0
    %117 = vmatprep.subr.mxu0 0.0
    %118 = vmatpush1.msra.mxu0 0.0
    %119 = vmatprep.subr.mxu0 0.0
    %120 = vmatpush1.msra.mxu0 0.0
    %121 = vmatprep.subr.mxu0 0.0
    %122 = vmatpush1.msra.mxu0 0.0
    %123 = vmatprep.subr.mxu0 0.0
    %124 = vmatpush1.msra.mxu0 0.0
    %125 = vmatprep.subr.mxu0 0.0
    %126 = vmatpush1.msra.mxu0 0.0
    %127 = vmatprep.subr.mxu0 0.0
    %128 = vmatpush1.msra.mxu0 0.0
    %129 = vmatprep.subr.mxu0 0.0
    %130 = vmatpush1.msra.mxu0 0.0
    %131 = vmatprep.subr.mxu0 0.0
    %132 = vmatpush1.msra.mxu0 0.0
    %133 = vmatprep.subr.mxu0 0.0
    %134 = vmatpush1.msra.mxu0 0.0
    %135 = vmatprep.subr.mxu0 0.0
    %136 = vmatpush1.msra.mxu0 0.0
    %137 = vmatprep.mubr.f32.mxu0 0.0
    %138 = vmatmul.mubr.f32.gmra.mrb[0].mxu0 %v62
    %v139 = vpop.f32.mrb[0].mxu0
    %v140 = vadd.f32 %v58, %v139
    %v141 = vpop.f32.mrb[0].mxu0
    %142 = vmatprep.mubr.f32.mxu0 0.0
    %143 = vmatmul.mubr.f32.gmra.mrb[0].mxu0 %v65
    %v144 = vpop.f32.mrb[0].mxu0
    %v145 = vadd.f32 %v58, %v144
    %v146 = vpop.f32.mrb[0].mxu0
    %147 = vmatprep.mubr.f32.mxu0 0.0
    %148 = vmatmul.mubr.f32.gmra.mrb[0].mxu0 %v68
    %v149 = vpop.f32.mrb[0].mxu0
    %v150 = vadd.f32 %v58, %v149
    %v151 = vpop.f32.mrb[0].mxu0
    %152 = vmatprep.mubr.f32.mxu0 0.0
    %153 = vmatmul.mubr.f32.gmra.mrb[0].mxu0 %v71
    %v154 = vpop.f32.mrb[0].mxu0
    %v155 = vadd.f32 %v58, %v154
    %v156 = vpop.f32.mrb[0].mxu0
    %157 = vdwg.mxu0
    %v158 = vmax.f32 %v140, 0.01
    %v159 = vmax.f32 %v145, 0.01
    %v160 = vmax.f32 %v150, 0.01
    %v161 = vmax.f32 %v155, 0.01
    %v162 = vmin.f32 %v158, 0.02
    %v163 = vmin.f32 %v159, 0.02
    %v164 = vmin.f32 %v160, 0.02
    %v165 = vmin.f32 %v161, 0.02
    %166 = vst [vmem:[#allocation7] sm:$0xff] %v162
    %167 = vst [vmem:[#allocation7 + $0x8] sm:$0xff] %v163
    %168 = vst [vmem:[#allocation7 + $0x10] sm:$0xff] %v164
    %169 = vst [vmem:[#allocation7 + $0x18] sm:$0xff] %v165
    // Predicated region
    $region22: #{tpu_custom_call.1} parent=1 // pred_check
      _
    $region23: #{tpu_custom_call.1} parent=1 // pred_check_branch
      %171 = sbr.rel (0) target = $region25
    $region24: #{tpu_custom_call.1} parent=1 // pred_region
      %s173 = ssub.s32 512, 512
      %174 = vsyncadd [#allocation4], %s173
      %s175 = sshll.u32 [#allocation7], 4
      %s176 = int_to_ptr.vmem [resolvable:$true] %s175
      %181 = dma.vmem_to_hbm [thread:$0]  %s176, 512, %s3, [#allocation4], 128, 128, 8
    $region25: #{tpu_custom_call.1} parent=1 // pred_fallthru
      _
    // Predicated region
    $region26: #{tpu_custom_call.1} parent=1 // pred_check
      _
    $region27: #{tpu_custom_call.1} parent=1 // pred_check_branch
      %183 = sbr.rel (0) target = $region29
    $region28: #{tpu_custom_call.1} parent=1 // pred_region
      %184 = dma.done [#allocation4], 512
    $region29: #{tpu_custom_call.1} parent=1 // pred_fallthru
      _
    %185 = vsyncpa [#allocation3], 1
    %186 = vsyncpa [#allocation6], 1
    %187 = vsyncpa [#allocation4], 1

</llo_original>
